<compile_context>
chip_gen: v7x
topology: tpu7x:2x2x1
jax: 0.10.0
libtpu: 0.0.40
codegen_flags: <defaults>
</compile_context>

<pallas_src>
import jax
import jax.numpy as jnp
from jax.experimental import pallas as pl
from jax.experimental.pallas import tpu as pltpu

IN_DIM = 20 * 20        # 400
HID = 100
LATENT = 20

HID_PAD = 128           # hidden width padded to one lane-width
LAT_PAD = 128           # mu / logvar each occupy one 128-lane half of the fused slab
ENC_OUT = 2 * LAT_PAD   # fused encoder head output width (mu | logvar)

DEFAULT_TB = 1024       # batch rows per grid step


def vae_kernel(x_ref, eps_ref,
               w1_ref, b1_ref,
               wenc_ref, benc_ref,
               w3_ref, b3_ref,
               w4_ref, b4_ref,
               recon_ref, mulv_ref):
    x = x_ref[...]        # (TB, 400)  f32
    eps = eps_ref[...]    # (TB, 128)  f32, zero beyond column LATENT

    # --- encode ---
    h1 = jnp.dot(x, w1_ref[...], preferred_element_type=jnp.float32) + b1_ref[...]
    h1 = jnp.maximum(h1, 0.0)                                       # (TB, 128)

    # fused fc21|fc22 head -> lane-dense (TB, 256) slab
    mulv = jnp.dot(h1, wenc_ref[...], preferred_element_type=jnp.float32) + benc_ref[...]
    mu = mulv[:, :LAT_PAD]        # (TB, 128) lane-aligned slice (no cross-lane move)
    logvar = mulv[:, LAT_PAD:]    # (TB, 128)

    # --- reparameterize ---
    # padded cols: mu=0, logvar=0 -> std=1, but eps=0 there, so z=0 (and w3 rows
    # beyond LATENT are zero anyway).
    z = mu + eps * jnp.exp(0.5 * logvar)

    # --- decode ---
    h3 = jnp.dot(z, w3_ref[...], preferred_element_type=jnp.float32) + b3_ref[...]
    h3 = jnp.maximum(h3, 0.0)                                       # (TB, 128)
    logits = jnp.dot(h3, w4_ref[...], preferred_element_type=jnp.float32) + b4_ref[...]
    # sigmoid: exp + approximate reciprocal both ride the EUP slot
    recon = pl.reciprocal(1.0 + jnp.exp(-logits), approx=True)

    recon_ref[...] = recon
    mulv_ref[...] = mulv


def vae_forward(x, eps, packed, *, batch_tile=DEFAULT_TB):
    """x: (B,1,20,20) or (B,400); eps: (B,20).
    Returns (recon (B,400), mu (B,20), logvar (B,20))."""
    x2 = x.reshape(-1, IN_DIM).astype(jnp.float32)          # == x.view(-1, 20*20)
    B = x2.shape[0]
    eps_pad = jnp.pad(eps.astype(jnp.float32), ((0, 0), (0, LAT_PAD - LATENT)))

    tb = min(batch_tile, B)
    grid = (pl.cdiv(B, tb),)

    def row_spec(width):
        return pl.BlockSpec((tb, width), lambda i: (i, 0))

    def pinned(shape):
        # same block index every step -> fetched once, resident in VMEM
        return pl.BlockSpec(shape, lambda i: (0, 0))

    in_specs = [
        row_spec(IN_DIM),                 # x
        row_spec(LAT_PAD),                # eps
        pinned((IN_DIM, HID_PAD)), pinned((1, HID_PAD)),     # fc1
        pinned((HID_PAD, ENC_OUT)), pinned((1, ENC_OUT)),    # fused fc21|fc22
        pinned((LAT_PAD, HID_PAD)), pinned((1, HID_PAD)),    # fc3
        pinned((HID_PAD, IN_DIM)), pinned((1, IN_DIM)),      # fc4
    ]
    out_specs = (row_spec(IN_DIM), row_spec(ENC_OUT))

    recon, mulv = pl.pallas_call(
        vae_kernel,
        out_shape=(
            jax.ShapeDtypeStruct((B, IN_DIM), jnp.float32),
            jax.ShapeDtypeStruct((B, ENC_OUT), jnp.float32),
        ),
        grid_spec=pltpu.PrefetchScalarGridSpec(
            num_scalar_prefetch=0,
            grid=grid,
            in_specs=in_specs,
            out_specs=out_specs,
        ),
        compiler_params=pltpu.CompilerParams(
            dimension_semantics=("parallel",),      # megacore sharding on v7x
            vmem_limit_bytes=32 * 1024 * 1024,
        ),
    )(x2, eps_pad,
      packed["w1"], packed["b1"],
      packed["wenc"], packed["benc"],
      packed["w3"], packed["b3"],
      packed["w4"], packed["b4"])

    mu = mulv[:, :LATENT]
    logvar = mulv[:, LAT_PAD:LAT_PAD + LATENT]
    return recon, mu, logvar


def init_params(key):
    """PyTorch nn.Linear default init (uniform +/- 1/sqrt(fan_in)).
    Logical shapes: weights (in, out), biases (out,)."""
    def linear(key, fan_in, fan_out):
        kw, kb = jax.random.split(key)
        bound = 1.0 / jnp.sqrt(fan_in)
        w = jax.random.uniform(kw, (fan_in, fan_out), jnp.float32, -bound, bound)
        b = jax.random.uniform(kb, (fan_out,), jnp.float32, -bound, bound)
        return w, b

    k1, k21, k22, k3, k4 = jax.random.split(key, 5)
    p = {}
    p["w1"], p["b1"] = linear(k1, IN_DIM, HID)
    p["w21"], p["b21"] = linear(k21, HID, LATENT)
    p["w22"], p["b22"] = linear(k22, HID, LATENT)
    p["w3"], p["b3"] = linear(k3, LATENT, HID)
    p["w4"], p["b4"] = linear(k4, HID, IN_DIM)
    return p


def pack_params(p):
    """Zero-pad HID->128, LATENT->128 and fuse fc21|fc22 into one lane-dense head."""
    f32 = jnp.float32
    w1p = jnp.zeros((IN_DIM, HID_PAD), f32).at[:, :HID].set(p["w1"])
    b1p = jnp.zeros((1, HID_PAD), f32).at[:, :HID].set(p["b1"].reshape(1, HID))
    wencp = (jnp.zeros((HID_PAD, ENC_OUT), f32)
             .at[:HID, :LATENT].set(p["w21"])
             .at[:HID, LAT_PAD:LAT_PAD + LATENT].set(p["w22"]))
    bencp = (jnp.zeros((1, ENC_OUT), f32)
             .at[:, :LATENT].set(p["b21"].reshape(1, LATENT))
             .at[:, LAT_PAD:LAT_PAD + LATENT].set(p["b22"].reshape(1, LATENT)))
    w3p = jnp.zeros((LAT_PAD, HID_PAD), f32).at[:LATENT, :HID].set(p["w3"])
    b3p = jnp.zeros((1, HID_PAD), f32).at[:, :HID].set(p["b3"].reshape(1, HID))
    w4p = jnp.zeros((HID_PAD, IN_DIM), f32).at[:HID, :].set(p["w4"])
    b4p = p["b4"].reshape(1, IN_DIM).astype(f32)
    return dict(w1=w1p, b1=b1p, wenc=wencp, benc=bencp,
                w3=w3p, b3=b3p, w4=w4p, b4=b4p)


if __name__ == "__main__":
    root = jax.random.PRNGKey(0)
    k_params, k_x, k_eps = jax.random.split(root, 3)

    B = 2
    params = init_params(k_params)
    packed = pack_params(params)
    x = jax.random.uniform(k_x, (B, 1, 20, 20), jnp.float32)     # MNIST-like NCHW input
    eps = jax.random.normal(k_eps, (B, LATENT), jnp.float32)     # torch.randn_like(std)

    recon, mu, logvar = jax.jit(vae_forward)(x, eps, packed)
    jax.block_until_ready((recon, mu, logvar))

    # pure-JAX reference on the logical (unpadded) params
    def ref_forward(x, eps, p):
        x2 = x.reshape(-1, IN_DIM)
        h1 = jax.nn.relu(x2 @ p["w1"] + p["b1"])
        mu_r = h1 @ p["w21"] + p["b21"]
        lv_r = h1 @ p["w22"] + p["b22"]
        z = mu_r + eps * jnp.exp(0.5 * lv_r)
        h3 = jax.nn.relu(z @ p["w3"] + p["b3"])
        return jax.nn.sigmoid(h3 @ p["w4"] + p["b4"]), mu_r, lv_r

    r_ref, mu_r, lv_r = ref_forward(x, eps, params)
    assert recon.shape == (B, IN_DIM) and mu.shape == (B, LATENT) and logvar.shape == (B, LATENT)
    assert jnp.allclose(mu, mu_r, atol=1e-4, rtol=1e-4)
    assert jnp.allclose(logvar, lv_r, atol=1e-4, rtol=1e-4)
    # recon uses the EUP approximate reciprocal for the sigmoid -> looser tolerance
    assert jnp.allclose(recon, r_ref, atol=2e-3)
    print("KERNEL_OK")
</pallas_src>

<mosaic_0001>
module attributes {stable_mosaic.version = 11 : i64} {
  func.func @vae_kernel(%arg0: i32, %arg1: memref<2x400xf32, #tpu.memory_space<vmem>>, %arg2: memref<2x128xf32, #tpu.memory_space<vmem>>, %arg3: memref<400x128xf32, #tpu.memory_space<vmem>>, %arg4: memref<1x128xf32, #tpu.memory_space<vmem>>, %arg5: memref<128x256xf32, #tpu.memory_space<vmem>>, %arg6: memref<1x256xf32, #tpu.memory_space<vmem>>, %arg7: memref<128x128xf32, #tpu.memory_space<vmem>>, %arg8: memref<1x128xf32, #tpu.memory_space<vmem>>, %arg9: memref<128x400xf32, #tpu.memory_space<vmem>>, %arg10: memref<1x400xf32, #tpu.memory_space<vmem>>, %arg11: memref<2x400xf32, #tpu.memory_space<vmem>>, %arg12: memref<2x256xf32, #tpu.memory_space<vmem>>) attributes {dimension_semantics = [#tpu.dimension_semantics<parallel>], iteration_bounds = array<i64: 1>, scalar_prefetch = 0 : i64, scratch_operands = 0 : i64, tpu.core_type = #tpu.core_type<tc>, window_params = [{transform_indices = @transform_0, window_bounds = array<i64: 2, 400>}, {transform_indices = @transform_1, window_bounds = array<i64: 2, 128>}, {pipeline_mode = #tpu.pipeline_mode<synchronous>, transform_indices = @transform_2, window_bounds = array<i64: 400, 128>}, {pipeline_mode = #tpu.pipeline_mode<synchronous>, transform_indices = @transform_3, window_bounds = array<i64: 1, 128>}, {pipeline_mode = #tpu.pipeline_mode<synchronous>, transform_indices = @transform_4, window_bounds = array<i64: 128, 256>}, {pipeline_mode = #tpu.pipeline_mode<synchronous>, transform_indices = @transform_5, window_bounds = array<i64: 1, 256>}, {pipeline_mode = #tpu.pipeline_mode<synchronous>, transform_indices = @transform_6, window_bounds = array<i64: 128, 128>}, {pipeline_mode = #tpu.pipeline_mode<synchronous>, transform_indices = @transform_7, window_bounds = array<i64: 1, 128>}, {pipeline_mode = #tpu.pipeline_mode<synchronous>, transform_indices = @transform_8, window_bounds = array<i64: 128, 400>}, {pipeline_mode = #tpu.pipeline_mode<synchronous>, transform_indices = @transform_9, window_bounds = array<i64: 1, 400>}, {transform_indices = @transform_10, window_bounds = array<i64: 2, 400>}, {transform_indices = @transform_11, window_bounds = array<i64: 2, 256>}]} {
    %c0 = arith.constant 0 : index
    %c0_0 = arith.constant 0 : index
    %0 = vector.load %arg1[%c0, %c0_0] : memref<2x400xf32, #tpu.memory_space<vmem>>, vector<2x400xf32>
    %c0_1 = arith.constant 0 : index
    %c0_2 = arith.constant 0 : index
    %1 = vector.load %arg2[%c0_1, %c0_2] : memref<2x128xf32, #tpu.memory_space<vmem>>, vector<2x128xf32>
    %c0_3 = arith.constant 0 : index
    %c0_4 = arith.constant 0 : index
    %2 = vector.load %arg3[%c0_3, %c0_4] : memref<400x128xf32, #tpu.memory_space<vmem>>, vector<400x128xf32>
    %cst = arith.constant dense<0.000000e+00> : vector<2x128xf32>
    %3 = tpu.matmul %0, %2, %cst {dimension_numbers = #tpu.dot_dimension_numbers<[1], [0], [0], [1], [0, 0, 1, 1], [], []>} : vector<2x400xf32>, vector<400x128xf32>, vector<2x128xf32> -> vector<2x128xf32>
    %c0_5 = arith.constant 0 : index
    %c0_6 = arith.constant 0 : index
    %4 = vector.load %arg4[%c0_5, %c0_6] : memref<1x128xf32, #tpu.memory_space<vmem>>, vector<1x128xf32>
    %5 = vector.broadcast %4 : vector<1x128xf32> to vector<2x128xf32>
    %6 = arith.addf %3, %5 : vector<2x128xf32>
    %cst_7 = arith.constant 0.000000e+00 : f32
    %7 = vector.broadcast %cst_7 : f32 to vector<2x128xf32>
    %8 = arith.maximumf %6, %7 : vector<2x128xf32>
    %c0_8 = arith.constant 0 : index
    %c0_9 = arith.constant 0 : index
    %9 = vector.load %arg5[%c0_8, %c0_9] : memref<128x256xf32, #tpu.memory_space<vmem>>, vector<128x256xf32>
    %cst_10 = arith.constant dense<0.000000e+00> : vector<2x256xf32>
    %10 = tpu.matmul %8, %9, %cst_10 {dimension_numbers = #tpu.dot_dimension_numbers<[1], [0], [0], [1], [0, 0, 1, 1], [], []>} : vector<2x128xf32>, vector<128x256xf32>, vector<2x256xf32> -> vector<2x256xf32>
    %c0_11 = arith.constant 0 : index
    %c0_12 = arith.constant 0 : index
    %11 = vector.load %arg6[%c0_11, %c0_12] : memref<1x256xf32, #tpu.memory_space<vmem>>, vector<1x256xf32>
    %12 = vector.broadcast %11 : vector<1x256xf32> to vector<2x256xf32>
    %13 = arith.addf %10, %12 : vector<2x256xf32>
    %14 = vector.extract_strided_slice %13 {offsets = [0, 0], sizes = [2, 128], strides = [1, 1]} : vector<2x256xf32> to vector<2x128xf32>
    %15 = vector.extract_strided_slice %13 {offsets = [0, 128], sizes = [2, 128], strides = [1, 1]} : vector<2x256xf32> to vector<2x128xf32>
    %cst_13 = arith.constant 5.000000e-01 : f32
    %16 = vector.broadcast %cst_13 : f32 to vector<2x128xf32>
    %17 = arith.mulf %16, %15 : vector<2x128xf32>
    %18 = math.exp %17 : vector<2x128xf32>
    %19 = arith.mulf %1, %18 : vector<2x128xf32>
    %20 = arith.addf %14, %19 : vector<2x128xf32>
    %c0_14 = arith.constant 0 : index
    %c0_15 = arith.constant 0 : index
    %21 = vector.load %arg7[%c0_14, %c0_15] : memref<128x128xf32, #tpu.memory_space<vmem>>, vector<128x128xf32>
    %cst_16 = arith.constant dense<0.000000e+00> : vector<2x128xf32>
    %22 = tpu.matmul %20, %21, %cst_16 {dimension_numbers = #tpu.dot_dimension_numbers<[1], [0], [0], [1], [0, 0, 1, 1], [], []>} : vector<2x128xf32>, vector<128x128xf32>, vector<2x128xf32> -> vector<2x128xf32>
    %c0_17 = arith.constant 0 : index
    %c0_18 = arith.constant 0 : index
    %23 = vector.load %arg8[%c0_17, %c0_18] : memref<1x128xf32, #tpu.memory_space<vmem>>, vector<1x128xf32>
    %24 = vector.broadcast %23 : vector<1x128xf32> to vector<2x128xf32>
    %25 = arith.addf %22, %24 : vector<2x128xf32>
    %cst_19 = arith.constant 0.000000e+00 : f32
    %26 = vector.broadcast %cst_19 : f32 to vector<2x128xf32>
    %27 = arith.maximumf %25, %26 : vector<2x128xf32>
    %c0_20 = arith.constant 0 : index
    %c0_21 = arith.constant 0 : index
    %28 = vector.load %arg9[%c0_20, %c0_21] : memref<128x400xf32, #tpu.memory_space<vmem>>, vector<128x400xf32>
    %cst_22 = arith.constant dense<0.000000e+00> : vector<2x400xf32>
    %29 = tpu.matmul %27, %28, %cst_22 {dimension_numbers = #tpu.dot_dimension_numbers<[1], [0], [0], [1], [0, 0, 1, 1], [], []>} : vector<2x128xf32>, vector<128x400xf32>, vector<2x400xf32> -> vector<2x400xf32>
    %c0_23 = arith.constant 0 : index
    %c0_24 = arith.constant 0 : index
    %30 = vector.load %arg10[%c0_23, %c0_24] : memref<1x400xf32, #tpu.memory_space<vmem>>, vector<1x400xf32>
    %31 = vector.broadcast %30 : vector<1x400xf32> to vector<2x400xf32>
    %32 = arith.addf %29, %31 : vector<2x400xf32>
    %cst_25 = arith.constant 0.000000e+00 : f32
    %33 = vector.broadcast %cst_25 : f32 to vector<2x400xf32>
    %34 = arith.subf %33, %32 : vector<2x400xf32>
    %35 = math.exp %34 : vector<2x400xf32>
    %cst_26 = arith.constant 1.000000e+00 : f32
    %36 = vector.broadcast %cst_26 : f32 to vector<2x400xf32>
    %37 = arith.addf %36, %35 : vector<2x400xf32>
    %38 = tpu.reciprocal %37 {approx = true} : vector<2x400xf32> -> vector<2x400xf32>
    %c0_27 = arith.constant 0 : index
    %c0_28 = arith.constant 0 : index
    %39 = vector.load %arg11[%c0_27, %c0_28] : memref<2x400xf32, #tpu.memory_space<vmem>>, vector<2x400xf32>
    tpu.vector_store %arg11[%c0_27, %c0_28], %38 {strides = array<i32>} : memref<2x400xf32, #tpu.memory_space<vmem>>, vector<2x400xf32>,
    %c0_29 = arith.constant 0 : index
    %c0_30 = arith.constant 0 : index
    %40 = vector.load %arg12[%c0_29, %c0_30] : memref<2x256xf32, #tpu.memory_space<vmem>>, vector<2x256xf32>
    tpu.vector_store %arg12[%c0_29, %c0_30], %13 {strides = array<i32>} : memref<2x256xf32, #tpu.memory_space<vmem>>, vector<2x256xf32>,
    return
  }
  func.func @transform_0(%arg0: i32) -> (i32, i32) {
    %c0_i32 = arith.constant 0 : i32
    %c0_i32_0 = arith.constant 0 : i32
    return %arg0, %c0_i32 : i32, i32
  }
  func.func @transform_1(%arg0: i32) -> (i32, i32) {
    %c0_i32 = arith.constant 0 : i32
    %c0_i32_0 = arith.constant 0 : i32
    return %arg0, %c0_i32 : i32, i32
  }
  func.func @transform_2(%arg0: i32) -> (i32, i32) {
    %c0_i32 = arith.constant 0 : i32
    %c0_i32_0 = arith.constant 0 : i32
    %c0_i32_1 = arith.constant 0 : i32
    return %c0_i32, %c0_i32_0 : i32, i32
  }
  func.func @transform_3(%arg0: i32) -> (i32, i32) {
    %c0_i32 = arith.constant 0 : i32
    %c0_i32_0 = arith.constant 0 : i32
    %c0_i32_1 = arith.constant 0 : i32
    return %c0_i32, %c0_i32_0 : i32, i32
  }
  func.func @transform_4(%arg0: i32) -> (i32, i32) {
    %c0_i32 = arith.constant 0 : i32
    %c0_i32_0 = arith.constant 0 : i32
    %c0_i32_1 = arith.constant 0 : i32
    return %c0_i32, %c0_i32_0 : i32, i32
  }
  func.func @transform_5(%arg0: i32) -> (i32, i32) {
    %c0_i32 = arith.constant 0 : i32
    %c0_i32_0 = arith.constant 0 : i32
    %c0_i32_1 = arith.constant 0 : i32
    return %c0_i32, %c0_i32_0 : i32, i32
  }
  func.func @transform_6(%arg0: i32) -> (i32, i32) {
    %c0_i32 = arith.constant 0 : i32
    %c0_i32_0 = arith.constant 0 : i32
    %c0_i32_1 = arith.constant 0 : i32
    return %c0_i32, %c0_i32_0 : i32, i32
  }
  func.func @transform_7(%arg0: i32) -> (i32, i32) {
    %c0_i32 = arith.constant 0 : i32
    %c0_i32_0 = arith.constant 0 : i32
    %c0_i32_1 = arith.constant 0 : i32
    return %c0_i32, %c0_i32_0 : i32, i32
  }
  func.func @transform_8(%arg0: i32) -> (i32, i32) {
    %c0_i32 = arith.constant 0 : i32
    %c0_i32_0 = arith.constant 0 : i32
    %c0_i32_1 = arith.constant 0 : i32
    return %c0_i32, %c0_i32_0 : i32, i32
  }
  func.func @transform_9(%arg0: i32) -> (i32, i32) {
    %c0_i32 = arith.constant 0 : i32
    %c0_i32_0 = arith.constant 0 : i32
    %c0_i32_1 = arith.constant 0 : i32
    return %c0_i32, %c0_i32_0 : i32, i32
  }
  func.func @transform_10(%arg0: i32) -> (i32, i32) {
    %c0_i32 = arith.constant 0 : i32
    %c0_i32_0 = arith.constant 0 : i32
    return %arg0, %c0_i32 : i32, i32
  }
  func.func @transform_11(%arg0: i32) -> (i32, i32) {
    %c0_i32 = arith.constant 0 : i32
    %c0_i32_0 = arith.constant 0 : i32
    return %arg0, %c0_i32 : i32, i32
  }
}

</mosaic_0001>

<llo_original>
// kernel: vae_forward.1
$region0: #{vae_forward.1}
  #allocation0 [shape = 'u32[]', space=smem, size = 0x4, offset = 0x4, fixed_abs, tag = 'smem constant byte address 0x4 - core index']
  #allocation1 [shape = 'u32[144,128]{1,0:T(1,128)}', space=vmem, size = 0x12000, scoped, tag = 'internal scratch']
  %s0 = inlined_call_operand.vmem [shape: f32[2,400], index: 0, kind: input, shape index: {}]
  %s1 = inlined_call_operand.vmem [shape: f32[2,128], index: 1, kind: input, shape index: {}]
  %s2 = inlined_call_operand.vmem [shape: f32[400,128], index: 2, kind: input, shape index: {}]
  %s3 = inlined_call_operand.vmem [shape: f32[1,128], index: 3, kind: input, shape index: {}]
  %s4 = inlined_call_operand.vmem [shape: f32[128,256], index: 4, kind: input, shape index: {}]
  %s5 = inlined_call_operand.vmem [shape: f32[1,256], index: 5, kind: input, shape index: {}]
  %s6 = inlined_call_operand.vmem [shape: f32[128,128], index: 6, kind: input, shape index: {}]
  %s7 = inlined_call_operand.vmem [shape: f32[1,128], index: 7, kind: input, shape index: {}]
  %s8 = inlined_call_operand.vmem [shape: f32[128,400], index: 8, kind: input, shape index: {}]
  %s9 = inlined_call_operand.vmem [shape: f32[1,400], index: 9, kind: input, shape index: {}]
  %s10 = inlined_call_operand.hbm [shape: f32[2,400], index: 10, kind: output, shape index: {0}]
  %s11 = inlined_call_operand.vmem [shape: f32[2,256], index: 11, kind: output, shape index: {1}]
  %12 = xla_tuple %s10, %s11
  %s13 = sld [smem:[#allocation0]]
  $region58: #{vae_forward.1} parent=0
    _
  %s15 = ssub.s32 1, %s13
  %s16 = scalar_select 0, %s15, %s13
  $region1: #{vae_forward.1} parent=0
    #allocation2 [shape = 'u8[4096]{0}', space=vmem, size = 0x1000, scoped, tag = 'output window, operand 0, single buffered']
    #allocation3 [shape = 's32[1]{0}', space=sflag, size = 0x4, scoped, tag = 'scoped memory for vae_forward.1']
    %17 = vsyncpa [#allocation3], 0
    // Predicated region
    $region2: #{vae_forward.1} parent=1 // pred_check
      _
    $region3: #{vae_forward.1} parent=1 // pred_check_branch
      %19 = sbr.rel (0) target = $region5
    $region4: #{vae_forward.1} parent=1 // pred_region
      _
    $region5: #{vae_forward.1} parent=1 // pred_fallthru
      _
    // Predicated region
    $region6: #{vae_forward.1} parent=1 // pred_check
      _
    $region7: #{vae_forward.1} parent=1 // pred_check_branch
      %21 = sbr.rel (0) target = $region9
    $region8: #{vae_forward.1} parent=1 // pred_region
      _
    $region9: #{vae_forward.1} parent=1 // pred_fallthru
      _
    // Predicated region
    $region10: #{vae_forward.1} parent=1 // pred_check
      _
    $region11: #{vae_forward.1} parent=1 // pred_check_branch
      %23 = sbr.rel (0) target = $region13
    $region12: #{vae_forward.1} parent=1 // pred_region
      _
    $region13: #{vae_forward.1} parent=1 // pred_fallthru
      _
    // Predicated region
    $region14: #{vae_forward.1} parent=1 // pred_check
      _
    $region15: #{vae_forward.1} parent=1 // pred_check_branch
      %25 = sbr.rel (0) target = $region17
    $region16: #{vae_forward.1} parent=1 // pred_region
      _
    $region17: #{vae_forward.1} parent=1 // pred_fallthru
      _
    // Predicated region
    $region18: #{vae_forward.1} parent=1 // pred_check
      _
    $region19: #{vae_forward.1} parent=1 // pred_check_branch
      %27 = sbr.rel (0) target = $region21
    $region20: #{vae_forward.1} parent=1 // pred_region
      _
    $region21: #{vae_forward.1} parent=1 // pred_fallthru
      _
    // Predicated region
    $region22: #{vae_forward.1} parent=1 // pred_check
      _
    $region23: #{vae_forward.1} parent=1 // pred_check_branch
      %29 = sbr.rel (0) target = $region25
    $region24: #{vae_forward.1} parent=1 // pred_region
      _
    $region25: #{vae_forward.1} parent=1 // pred_fallthru
      _
    // Predicated region
    $region26: #{vae_forward.1} parent=1 // pred_check
      _
    $region27: #{vae_forward.1} parent=1 // pred_check_branch
      %31 = sbr.rel (0) target = $region29
    $region28: #{vae_forward.1} parent=1 // pred_region
      _
    $region29: #{vae_forward.1} parent=1 // pred_fallthru
      _
    // Predicated region
    $region30: #{vae_forward.1} parent=1 // pred_check
      _
    $region31: #{vae_forward.1} parent=1 // pred_check_branch
      %33 = sbr.rel (0) target = $region33
    $region32: #{vae_forward.1} parent=1 // pred_region
      _
    $region33: #{vae_forward.1} parent=1 // pred_fallthru
      _
    // Predicated region
    $region34: #{vae_forward.1} parent=1 // pred_check
      _
    $region35: #{vae_forward.1} parent=1 // pred_check_branch
      %35 = sbr.rel (0) target = $region37
    $region36: #{vae_forward.1} parent=1 // pred_region
      _
    $region37: #{vae_forward.1} parent=1 // pred_fallthru
      _
    // Predicated region
    $region38: #{vae_forward.1} parent=1 // pred_check
      _
    $region39: #{vae_forward.1} parent=1 // pred_check_branch
      %37 = sbr.rel (0) target = $region41
    $region40: #{vae_forward.1} parent=1 // pred_region
      _
    $region41: #{vae_forward.1} parent=1 // pred_fallthru
      _
    %v38 = vld [vmem:[%s0] sm:$0xff]
    %v39 = vld [vmem:[%s1] sm:$0x3]
    %v40 = vld [vmem:[%s2] sm:$0xff]
    %v41 = vld [vmem:[%s2 + $0x8] sm:$0xff]
    %v42 = vld [vmem:[%s2 + $0x10] sm:$0xff]
    %v43 = vld [vmem:[%s2 + $0x18] sm:$0xff]
    %v44 = vld [vmem:[%s2 + $0x20] sm:$0xff]
    %v45 = vld [vmem:[%s2 + $0x28] sm:$0xff]
    %v46 = vld [vmem:[%s2 + $0x30] sm:$0xff]
    %v47 = vld [vmem:[%s2 + $0x38] sm:$0xff]
    %v48 = vld [vmem:[%s2 + $0x40] sm:$0xff]
    %v49 = vld [vmem:[%s2 + $0x48] sm:$0xff]
    %v50 = vld [vmem:[%s2 + $0x50] sm:$0xff]
    %v51 = vld [vmem:[%s2 + $0x58] sm:$0xff]
    %v52 = vld [vmem:[%s2 + $0x60] sm:$0xff]
    %v53 = vld [vmem:[%s2 + $0x68] sm:$0xff]
    %v54 = vld [vmem:[%s2 + $0x70] sm:$0xff]
    %v55 = vld [vmem:[%s2 + $0x78] sm:$0xff]
    %v56 = vld [vmem:[%s2 + $0x80] sm:$0xff]
    %v57 = vld [vmem:[%s2 + $0x88] sm:$0xff]
    %v58 = vld [vmem:[%s2 + $0x90] sm:$0xff]
    %v59 = vld [vmem:[%s2 + $0x98] sm:$0xff]
    %v60 = vld [vmem:[%s2 + $0xa0] sm:$0xff]
    %v61 = vld [vmem:[%s2 + $0xa8] sm:$0xff]
    %v62 = vld [vmem:[%s2 + $0xb0] sm:$0xff]
    %v63 = vld [vmem:[%s2 + $0xb8] sm:$0xff]
    %v64 = vld [vmem:[%s2 + $0xc0] sm:$0xff]
    %v65 = vld [vmem:[%s2 + $0xc8] sm:$0xff]
    %v66 = vld [vmem:[%s2 + $0xd0] sm:$0xff]
    %v67 = vld [vmem:[%s2 + $0xd8] sm:$0xff]
    %v68 = vld [vmem:[%s2 + $0xe0] sm:$0xff]
    %v69 = vld [vmem:[%s2 + $0xe8] sm:$0xff]
    %v70 = vld [vmem:[%s2 + $0xf0] sm:$0xff]
    %v71 = vld [vmem:[%s2 + $0xf8] sm:$0xff]
    %v72 = vld [vmem:[%s2 + $0x100] sm:$0xff]
    %v73 = vld [vmem:[%s2 + $0x108] sm:$0xff]
    %v74 = vld [vmem:[%s2 + $0x110] sm:$0xff]
    %v75 = vld [vmem:[%s2 + $0x118] sm:$0xff]
    %v76 = vld [vmem:[%s2 + $0x120] sm:$0xff]
    %v77 = vld [vmem:[%s2 + $0x128] sm:$0xff]
    %v78 = vld [vmem:[%s2 + $0x130] sm:$0xff]
    %v79 = vld [vmem:[%s2 + $0x138] sm:$0xff]
    %v80 = vld [vmem:[%s2 + $0x140] sm:$0xff]
    %v81 = vld [vmem:[%s2 + $0x148] sm:$0xff]
    %v82 = vld [vmem:[%s2 + $0x150] sm:$0xff]
    %v83 = vld [vmem:[%s2 + $0x158] sm:$0xff]
    %v84 = vld [vmem:[%s2 + $0x160] sm:$0xff]
    %v85 = vld [vmem:[%s2 + $0x168] sm:$0xff]
    %v86 = vld [vmem:[%s2 + $0x170] sm:$0xff]
    %v87 = vld [vmem:[%s2 + $0x178] sm:$0xff]
    %v88 = vld [vmem:[%s2 + $0x180] sm:$0xff]
    %v89 = vld [vmem:[%s2 + $0x188] sm:$0xff]
    %v90 = vld [vmem:[%s3] sm:$0x1]
    %v92 = vlaneseq
    %v93 = vshrl.u32 %v92, 7
    %v94 = vsub.s32 0, %v93
    %v95 = vrot.slane %v90, %v94
    %v98 = vcombine.high %v38, %v38
    %v100 = vunpack.c.l.s4 1983009808
    %v101 = vunpack.c.0.s8 %v100
    %v102 = vlaneseq
    %v103 = vshrl.u32 %v102, 7
    %v104 = vsub.s32 %v101, %v103
    %v105 = vrot.slane %v38, %v104
    %v107 = vunpack.c.l.s4 1983009808
    %v108 = vunpack.c.0.s8 %v107
    %v109 = vlaneseq
    %v110 = vshrl.u32 %v109, 7
    %v111 = vsub.s32 %v108, %v110
    %v112 = vrot.slane %v98, %v111
    %v113 = vcombine.high %v105, %v105
    %v114 = vcombine.high %v112, %v112
    %vm118 = vcmask 130048
    %v119 = vsel %vm118, %v114, 0
    %121 = vmatprep.subr.mxu0 0.0
    %122 = vmatpush1.msra.mxu0 %v40
    %123 = vmatprep.subr.mxu0 0.0
    %124 = vmatpush1.msra.mxu0 %v41
    %125 = vmatprep.subr.mxu0 0.0
    %126 = vmatpush1.msra.mxu0 %v42
    %127 = vmatprep.subr.mxu0 0.0
    %128 = vmatpush1.msra.mxu0 %v43
    %129 = vmatprep.subr.mxu0 0.0
    %130 = vmatpush1.msra.mxu0 %v44
    %131 = vmatprep.subr.mxu0 0.0
    %132 = vmatpush1.msra.mxu0 %v45
    %133 = vmatprep.subr.mxu0 0.0
    %134 = vmatpush1.msra.mxu0 %v46
    %135 = vmatprep.subr.mxu0 0.0
    %136 = vmatpush1.msra.mxu0 %v47
    %137 = vmatprep.subr.mxu0 0.0
    %138 = vmatpush1.msra.mxu0 %v48
    %139 = vmatprep.subr.mxu0 0.0
    %140 = vmatpush1.msra.mxu0 %v49
    %141 = vmatprep.subr.mxu0 0.0
    %142 = vmatpush1.msra.mxu0 %v50
    %143 = vmatprep.subr.mxu0 0.0
    %144 = vmatpush1.msra.mxu0 %v51
    %145 = vmatprep.subr.mxu0 0.0
    %146 = vmatpush1.msra.mxu0 %v52
    %147 = vmatprep.subr.mxu0 0.0
    %148 = vmatpush1.msra.mxu0 %v53
    %149 = vmatprep.subr.mxu0 0.0
    %150 = vmatpush1.msra.mxu0 %v54
    %151 = vmatprep.subr.mxu0 0.0
    %152 = vmatpush1.msra.mxu0 %v55
    %153 = vmatprep.subr.mxu0 0.0
    %154 = vmatpush1.msra.mxu0 %v56
    %155 = vmatprep.subr.mxu0 0.0
    %156 = vmatpush1.msra.mxu0 %v57
    %157 = vmatprep.subr.mxu0 0.0
    %158 = vmatpush1.msra.mxu0 %v58
    %159 = vmatprep.subr.mxu0 0.0
    %160 = vmatpush1.msra.mxu0 %v59
    %161 = vmatprep.subr.mxu0 0.0
    %162 = vmatpush1.msra.mxu0 %v60
    %163 = vmatprep.subr.mxu0 0.0
    %164 = vmatpush1.msra.mxu0 %v61
    %165 = vmatprep.subr.mxu0 0.0
    %166 = vmatpush1.msra.mxu0 %v62
    %167 = vmatprep.subr.mxu0 0.0
    %168 = vmatpush1.msra.mxu0 %v63
    %169 = vmatprep.subr.mxu0 0.0
    %170 = vmatpush1.msra.mxu0 %v64
    %171 = vmatprep.subr.mxu0 0.0
    %172 = vmatpush1.msra.mxu0 %v65
    %173 = vmatprep.subr.mxu0 0.0
    %174 = vmatpush1.msra.mxu0 %v66
    %175 = vmatprep.subr.mxu0 0.0
    %176 = vmatpush1.msra.mxu0 %v67
    %177 = vmatprep.subr.mxu0 0.0
    %178 = vmatpush1.msra.mxu0 %v68
    %179 = vmatprep.subr.mxu0 0.0
    %180 = vmatpush1.msra.mxu0 %v69
    %181 = vmatprep.subr.mxu0 0.0
    %182 = vmatpush1.msra.mxu0 %v70
    %183 = vmatprep.subr.mxu0 0.0
    %184 = vmatpush1.msra.mxu0 %v71
    %185 = vmatprep.mubr.f32.mxu0 %v113
    %186 = vmatmul.mubr.f32.gmra.mrb[0].mxu0 %v105
    %v187 = vpop.f32.mrb[0].mxu0
    %v188 = vadd.f32 %v95, %v187
    %v189 = vpop.f32.mrb[0].mxu0
    %190 = vdwg.mxu0
    %191 = vmatprep.subr.mxu0 0.0
    %192 = vmatpush1.msra.mxu0 %v72
    %193 = vmatprep.subr.mxu0 0.0
    %194 = vmatpush1.msra.mxu0 %v73
    %195 = vmatprep.subr.mxu0 0.0
    %196 = vmatpush1.msra.mxu0 %v74
    %197 = vmatprep.subr.mxu0 0.0
    %198 = vmatpush1.msra.mxu0 %v75
    %199 = vmatprep.subr.mxu0 0.0
    %200 = vmatpush1.msra.mxu0 %v76
    %201 = vmatprep.subr.mxu0 0.0
    %202 = vmatpush1.msra.mxu0 %v77
    %203 = vmatprep.subr.mxu0 0.0
    %204 = vmatpush1.msra.mxu0 %v78
    %205 = vmatprep.subr.mxu0 0.0
    %206 = vmatpush1.msra.mxu0 %v79
    %207 = vmatprep.subr.mxu0 0.0
    %208 = vmatpush1.msra.mxu0 %v80
    %209 = vmatprep.subr.mxu0 0.0
    %210 = vmatpush1.msra.mxu0 %v81
    %211 = vmatprep.subr.mxu0 0.0
    %212 = vmatpush1.msra.mxu0 %v82
    %213 = vmatprep.subr.mxu0 0.0
    %214 = vmatpush1.msra.mxu0 %v83
    %215 = vmatprep.subr.mxu0 0.0
    %216 = vmatpush1.msra.mxu0 %v84
    %217 = vmatprep.subr.mxu0 0.0
    %218 = vmatpush1.msra.mxu0 %v85
    %219 = vmatprep.subr.mxu0 0.0
    %220 = vmatpush1.msra.mxu0 %v86
    %221 = vmatprep.subr.mxu0 0.0
    %222 = vmatpush1.msra.mxu0 %v87
    %223 = vmatprep.subr.mxu0 0.0
    %224 = vmatpush1.msra.mxu0 %v88
    %225 = vmatprep.subr.mxu0 0.0
    %226 = vmatpush1.msra.mxu0 %v89
    %227 = vmatprep.subr.mxu0 0.0
    %228 = vmatpush1.msra.mxu0 0.0
    %229 = vmatprep.subr.mxu0 0.0
    %230 = vmatpush1.msra.mxu0 0.0
    %231 = vmatprep.subr.mxu0 0.0
    %232 = vmatpush1.msra.mxu0 0.0
    %233 = vmatprep.subr.mxu0 0.0
    %234 = vmatpush1.msra.mxu0 0.0
    %235 = vmatprep.subr.mxu0 0.0
    %236 = vmatpush1.msra.mxu0 0.0
    %237 = vmatprep.subr.mxu0 0.0
    %238 = vmatpush1.msra.mxu0 0.0
    %239 = vmatprep.subr.mxu0 0.0
    %240 = vmatpush1.msra.mxu0 0.0
    %241 = vmatprep.subr.mxu0 0.0
    %242 = vmatpush1.msra.mxu0 0.0
    %243 = vmatprep.subr.mxu0 0.0
    %244 = vmatpush1.msra.mxu0 0.0
    %245 = vmatprep.subr.mxu0 0.0
    %246 = vmatpush1.msra.mxu0 0.0
    %247 = vmatprep.subr.mxu0 0.0
    %248 = vmatpush1.msra.mxu0 0.0
    %249 = vmatprep.subr.mxu0 0.0
    %250 = vmatpush1.msra.mxu0 0.0
    %251 = vmatprep.subr.mxu0 0.0
    %252 = vmatpush1.msra.mxu0 0.0
    %253 = vmatprep.subr.mxu0 0.0
    %254 = vmatpush1.msra.mxu0 0.0
    %255 = vmatprep.mubr.f32.mxu0 %v119
    %256 = vmatmul.mubr.f32.gmra.mrb[0].mxu0 %v112
    %v257 = vpop.f32.mrb[0].mxu0
    %v258 = vadd.f32 %v188, %v257
    %v259 = vpop.f32.mrb[0].mxu0
    %260 = vdwg.mxu0
    %v261 = vmax.f32 %v258, 0.0
    %v262 = vld [vmem:[%s4] sm:$0xff]
    %v263 = vld [vmem:[%s4 + $0x8] sm:$0xff]
    %v264 = vld [vmem:[%s4 + $0x10] sm:$0xff]
    %v265 = vld [vmem:[%s4 + $0x18] sm:$0xff]
    %v266 = vld [vmem:[%s4 + $0x20] sm:$0xff]
    %v267 = vld [vmem:[%s4 + $0x28] sm:$0xff]
    %v268 = vld [vmem:[%s4 + $0x30] sm:$0xff]
    %v269 = vld [vmem:[%s4 + $0x38] sm:$0xff]
    %v270 = vld [vmem:[%s4 + $0x40] sm:$0xff]
    %v271 = vld [vmem:[%s4 + $0x48] sm:$0xff]
    %v272 = vld [vmem:[%s4 + $0x50] sm:$0xff]
    %v273 = vld [vmem:[%s4 + $0x58] sm:$0xff]
    %v274 = vld [vmem:[%s4 + $0x60] sm:$0xff]
    %v275 = vld [vmem:[%s4 + $0x68] sm:$0xff]
    %v276 = vld [vmem:[%s4 + $0x70] sm:$0xff]
    %v277 = vld [vmem:[%s4 + $0x78] sm:$0xff]
    %v278 = vld [vmem:[%s4 + $0x80] sm:$0xff]
    %v279 = vld [vmem:[%s4 + $0x88] sm:$0xff]
    %v280 = vld [vmem:[%s4 + $0x90] sm:$0xff]
    %v281 = vld [vmem:[%s4 + $0x98] sm:$0xff]
    %v282 = vld [vmem:[%s4 + $0xa0] sm:$0xff]
    %v283 = vld [vmem:[%s4 + $0xa8] sm:$0xff]
    %v284 = vld [vmem:[%s4 + $0xb0] sm:$0xff]
    %v285 = vld [vmem:[%s4 + $0xb8] sm:$0xff]
    %v286 = vld [vmem:[%s4 + $0xc0] sm:$0xff]
    %v287 = vld [vmem:[%s4 + $0xc8] sm:$0xff]
    %v288 = vld [vmem:[%s4 + $0xd0] sm:$0xff]
    %v289 = vld [vmem:[%s4 + $0xd8] sm:$0xff]
    %v290 = vld [vmem:[%s4 + $0xe0] sm:$0xff]
    %v291 = vld [vmem:[%s4 + $0xe8] sm:$0xff]
    %v292 = vld [vmem:[%s4 + $0xf0] sm:$0xff]
    %v293 = vld [vmem:[%s4 + $0xf8] sm:$0xff]
    %v294 = vld [vmem:[%s5] sm:$0x3]
    %v296 = vlaneseq
    %v297 = vshrl.u32 %v296, 7
    %v298 = vsub.s32 0, %v297
    %v299 = vrot.slane %v294, %v298
    %v300 = vlaneseq
    %v301 = vshrl.u32 %v300, 7
    %v302 = vsub.s32 1, %v301
    %v303 = vrot.slane %v294, %v302
    %306 = vmatprep.subr.mxu0 %v263
    %307 = vmatpush1.msra.mxu0 %v262
    %308 = vmatprep.subr.mxu0 %v265
    %309 = vmatpush1.msra.mxu0 %v264
    %310 = vmatprep.subr.mxu0 %v267
    %311 = vmatpush1.msra.mxu0 %v266
    %312 = vmatprep.subr.mxu0 %v269
    %313 = vmatpush1.msra.mxu0 %v268
    %314 = vmatprep.subr.mxu0 %v271
    %315 = vmatpush1.msra.mxu0 %v270
    %316 = vmatprep.subr.mxu0 %v273
    %317 = vmatpush1.msra.mxu0 %v272
    %318 = vmatprep.subr.mxu0 %v275
    %319 = vmatpush1.msra.mxu0 %v274
    %320 = vmatprep.subr.mxu0 %v277
    %321 = vmatpush1.msra.mxu0 %v276
    %322 = vmatprep.subr.mxu0 %v279
    %323 = vmatpush1.msra.mxu0 %v278
    %324 = vmatprep.subr.mxu0 %v281
    %325 = vmatpush1.msra.mxu0 %v280
    %326 = vmatprep.subr.mxu0 %v283
    %327 = vmatpush1.msra.mxu0 %v282
    %328 = vmatprep.subr.mxu0 %v285
    %329 = vmatpush1.msra.mxu0 %v284
    %330 = vmatprep.subr.mxu0 %v287
    %331 = vmatpush1.msra.mxu0 %v286
    %332 = vmatprep.subr.mxu0 %v289
    %333 = vmatpush1.msra.mxu0 %v288
    %334 = vmatprep.subr.mxu0 %v291
    %335 = vmatpush1.msra.mxu0 %v290
    %336 = vmatprep.subr.mxu0 %v293
    %337 = vmatpush1.msra.mxu0 %v292
    %338 = vmatprep.subr.mxu0 0.0
    %339 = vmatpush1.msra.mxu0 0.0
    %340 = vmatprep.subr.mxu0 0.0
    %341 = vmatpush1.msra.mxu0 0.0
    %342 = vmatprep.subr.mxu0 0.0
    %343 = vmatpush1.msra.mxu0 0.0
    %344 = vmatprep.subr.mxu0 0.0
    %345 = vmatpush1.msra.mxu0 0.0
    %346 = vmatprep.subr.mxu0 0.0
    %347 = vmatpush1.msra.mxu0 0.0
    %348 = vmatprep.subr.mxu0 0.0
    %349 = vmatpush1.msra.mxu0 0.0
    %350 = vmatprep.subr.mxu0 0.0
    %351 = vmatpush1.msra.mxu0 0.0
    %352 = vmatprep.subr.mxu0 0.0
    %353 = vmatpush1.msra.mxu0 0.0
    %354 = vmatprep.subr.mxu0 0.0
    %355 = vmatpush1.msra.mxu0 0.0
    %356 = vmatprep.subr.mxu0 0.0
    %357 = vmatpush1.msra.mxu0 0.0
    %358 = vmatprep.subr.mxu0 0.0
    %359 = vmatpush1.msra.mxu0 0.0
    %360 = vmatprep.subr.mxu0 0.0
    %361 = vmatpush1.msra.mxu0 0.0
    %362 = vmatprep.subr.mxu0 0.0
    %363 = vmatpush1.msra.mxu0 0.0
    %364 = vmatprep.subr.mxu0 0.0
    %365 = vmatpush1.msra.mxu0 0.0
    %366 = vmatprep.subr.mxu0 0.0
    %367 = vmatpush1.msra.mxu0 0.0
    %368 = vmatprep.subr.mxu0 0.0
    %369 = vmatpush1.msra.mxu0 0.0
    %370 = vmatprep.mubr.f32.mxu0 0.0
    %371 = vmatmul.mubr.f32.gmra.mrb[0].mxu0 %v261
    %v372 = vpop.f32.mrb[0].mxu0
    %v373 = vadd.f32 %v299, %v372
    %v374 = vpop.f32.mrb[0].mxu0
    %v375 = vadd.f32 %v303, %v374
    %376 = vdwg.mxu0
    %v377 = vmul.f32 %v375, 0.5
    %v378 = vmul.f32 %v377, 1.442695
    %v379 = vpow.pop %v378
    %v380 = vmul.f32 %v39, %v379
    %v381 = vadd.f32 %v373, %v380
    %v382 = vld [vmem:[%s6] sm:$0xff]
    %v383 = vld [vmem:[%s6 + $0x8] sm:$0xff]
    %v384 = vld [vmem:[%s6 + $0x10] sm:$0xff]
    %v385 = vld [vmem:[%s6 + $0x18] sm:$0xff]
    %v386 = vld [vmem:[%s6 + $0x20] sm:$0xff]
    %v387 = vld [vmem:[%s6 + $0x28] sm:$0xff]
    %v388 = vld [vmem:[%s6 + $0x30] sm:$0xff]
    %v389 = vld [vmem:[%s6 + $0x38] sm:$0xff]
    %v390 = vld [vmem:[%s6 + $0x40] sm:$0xff]
    %v391 = vld [vmem:[%s6 + $0x48] sm:$0xff]
    %v392 = vld [vmem:[%s6 + $0x50] sm:$0xff]
    %v393 = vld [vmem:[%s6 + $0x58] sm:$0xff]
    %v394 = vld [vmem:[%s6 + $0x60] sm:$0xff]
    %v395 = vld [vmem:[%s6 + $0x68] sm:$0xff]
    %v396 = vld [vmem:[%s6 + $0x70] sm:$0xff]
    %v397 = vld [vmem:[%s6 + $0x78] sm:$0xff]
    %v398 = vld [vmem:[%s7] sm:$0x1]
    %v400 = vlaneseq
    %v401 = vshrl.u32 %v400, 7
    %v402 = vsub.s32 0, %v401
    %v403 = vrot.slane %v398, %v402
    %405 = vmatprep.subr.mxu0 0.0
    %406 = vmatpush1.msra.mxu0 %v382
    %407 = vmatprep.subr.mxu0 0.0
    %408 = vmatpush1.msra.mxu0 %v383
    %409 = vmatprep.subr.mxu0 0.0
    %410 = vmatpush1.msra.mxu0 %v384
    %411 = vmatprep.subr.mxu0 0.0
    %412 = vmatpush1.msra.mxu0 %v385
    %413 = vmatprep.subr.mxu0 0.0
    %414 = vmatpush1.msra.mxu0 %v386
    %415 = vmatprep.subr.mxu0 0.0
    %416 = vmatpush1.msra.mxu0 %v387
    %417 = vmatprep.subr.mxu0 0.0
    %418 = vmatpush1.msra.mxu0 %v388
    %419 = vmatprep.subr.mxu0 0.0
    %420 = vmatpush1.msra.mxu0 %v389
    %421 = vmatprep.subr.mxu0 0.0
    %422 = vmatpush1.msra.mxu0 %v390
    %423 = vmatprep.subr.mxu0 0.0
    %424 = vmatpush1.msra.mxu0 %v391
    %425 = vmatprep.subr.mxu0 0.0
    %426 = vmatpush1.msra.mxu0 %v392
    %427 = vmatprep.subr.mxu0 0.0
    %428 = vmatpush1.msra.mxu0 %v393
    %429 = vmatprep.subr.mxu0 0.0
    %430 = vmatpush1.msra.mxu0 %v394
    %431 = vmatprep.subr.mxu0 0.0
    %432 = vmatpush1.msra.mxu0 %v395
    %433 = vmatprep.subr.mxu0 0.0
    %434 = vmatpush1.msra.mxu0 %v396
    %435 = vmatprep.subr.mxu0 0.0
    %436 = vmatpush1.msra.mxu0 %v397
    %437 = vmatprep.subr.mxu0 0.0
    %438 = vmatpush1.msra.mxu0 0.0
    %439 = vmatprep.subr.mxu0 0.0
    %440 = vmatpush1.msra.mxu0 0.0
    %441 = vmatprep.subr.mxu0 0.0
    %442 = vmatpush1.msra.mxu0 0.0
    %443 = vmatprep.subr.mxu0 0.0
    %444 = vmatpush1.msra.mxu0 0.0
    %445 = vmatprep.subr.mxu0 0.0
    %446 = vmatpush1.msra.mxu0 0.0
    %447 = vmatprep.subr.mxu0 0.0
    %448 = vmatpush1.msra.mxu0 0.0
    %449 = vmatprep.subr.mxu0 0.0
    %450 = vmatpush1.msra.mxu0 0.0
    %451 = vmatprep.subr.mxu0 0.0
    %452 = vmatpush1.msra.mxu0 0.0
    %453 = vmatprep.subr.mxu0 0.0
    %454 = vmatpush1.msra.mxu0 0.0
    %455 = vmatprep.subr.mxu0 0.0
    %456 = vmatpush1.msra.mxu0 0.0
    %457 = vmatprep.subr.mxu0 0.0
    %458 = vmatpush1.msra.mxu0 0.0
    %459 = vmatprep.subr.mxu0 0.0
    %460 = vmatpush1.msra.mxu0 0.0
    %461 = vmatprep.subr.mxu0 0.0
    %462 = vmatpush1.msra.mxu0 0.0
    %463 = vmatprep.subr.mxu0 0.0
    %464 = vmatpush1.msra.mxu0 0.0
    %465 = vmatprep.subr.mxu0 0.0
    %466 = vmatpush1.msra.mxu0 0.0
    %467 = vmatprep.subr.mxu0 0.0
    %468 = vmatpush1.msra.mxu0 0.0
    %469 = vmatprep.mubr.f32.mxu0 0.0
    %470 = vmatmul.mubr.f32.gmra.mrb[0].mxu0 %v381
    %v471 = vpop.f32.mrb[0].mxu0
    %v472 = vadd.f32 %v403, %v471
    %v473 = vpop.f32.mrb[0].mxu0
    %474 = vdwg.mxu0
    %v475 = vmax.f32 %v472, 0.0
    %v476 = vld [vmem:[%s8] sm:$0xff]
    %v477 = vld [vmem:[%s8 + $0x8] sm:$0xff]
    %v478 = vld [vmem:[%s8 + $0x10] sm:$0xff]
    %v479 = vld [vmem:[%s8 + $0x18] sm:$0xff]
    %v480 = vld [vmem:[%s8 + $0x20] sm:$0xff]
    %v481 = vld [vmem:[%s8 + $0x28] sm:$0xff]
    %v482 = vld [vmem:[%s8 + $0x30] sm:$0xff]
    %v483 = vld [vmem:[%s8 + $0x38] sm:$0xff]
    %v484 = vld [vmem:[%s8 + $0x40] sm:$0xff]
    %v485 = vld [vmem:[%s8 + $0x48] sm:$0xff]
    %v486 = vld [vmem:[%s8 + $0x50] sm:$0xff]
    %v487 = vld [vmem:[%s8 + $0x58] sm:$0xff]
    %v488 = vld [vmem:[%s8 + $0x60] sm:$0xff]
    %v489 = vld [vmem:[%s8 + $0x68] sm:$0xff]
    %v490 = vld [vmem:[%s8 + $0x70] sm:$0xff]
    %v491 = vld [vmem:[%s8 + $0x78] sm:$0xff]
    %v492 = vld [vmem:[%s8 + $0x80] sm:$0xff]
    %v493 = vld [vmem:[%s8 + $0x88] sm:$0xff]
    %v494 = vld [vmem:[%s8 + $0x90] sm:$0xff]
    %v495 = vld [vmem:[%s8 + $0x98] sm:$0xff]
    %v496 = vld [vmem:[%s8 + $0xa0] sm:$0xff]
    %v497 = vld [vmem:[%s8 + $0xa8] sm:$0xff]
    %v498 = vld [vmem:[%s8 + $0xb0] sm:$0xff]
    %v499 = vld [vmem:[%s8 + $0xb8] sm:$0xff]
    %v500 = vld [vmem:[%s8 + $0xc0] sm:$0xff]
    %v501 = vld [vmem:[%s8 + $0xc8] sm:$0xff]
    %v502 = vld [vmem:[%s8 + $0xd0] sm:$0xff]
    %v503 = vld [vmem:[%s8 + $0xd8] sm:$0xff]
    %v504 = vld [vmem:[%s8 + $0xe0] sm:$0xff]
    %v505 = vld [vmem:[%s8 + $0xe8] sm:$0xff]
    %v506 = vld [vmem:[%s8 + $0xf0] sm:$0xff]
    %v507 = vld [vmem:[%s8 + $0xf8] sm:$0xff]
    %v508 = vld [vmem:[%s8 + $0x100] sm:$0xff]
    %v509 = vld [vmem:[%s8 + $0x108] sm:$0xff]
    %v510 = vld [vmem:[%s8 + $0x110] sm:$0xff]
    %v511 = vld [vmem:[%s8 + $0x118] sm:$0xff]
    %v512 = vld [vmem:[%s8 + $0x120] sm:$0xff]
    %v513 = vld [vmem:[%s8 + $0x128] sm:$0xff]
    %v514 = vld [vmem:[%s8 + $0x130] sm:$0xff]
    %v515 = vld [vmem:[%s8 + $0x138] sm:$0xff]
    %v516 = vld [vmem:[%s8 + $0x140] sm:$0xff]
    %v517 = vld [vmem:[%s8 + $0x148] sm:$0xff]
    %v518 = vld [vmem:[%s8 + $0x150] sm:$0xff]
    %v519 = vld [vmem:[%s8 + $0x158] sm:$0xff]
    %v520 = vld [vmem:[%s8 + $0x160] sm:$0xff]
    %v521 = vld [vmem:[%s8 + $0x168] sm:$0xff]
    %v522 = vld [vmem:[%s8 + $0x170] sm:$0xff]
    %v523 = vld [vmem:[%s8 + $0x178] sm:$0xff]
    %v524 = vld [vmem:[%s8 + $0x180] sm:$0xff]
    %v525 = vld [vmem:[%s8 + $0x188] sm:$0xff]
    %v526 = vld [vmem:[%s8 + $0x190] sm:$0xff]
    %v527 = vld [vmem:[%s8 + $0x198] sm:$0xff]
    %v528 = vld [vmem:[%s8 + $0x1a0] sm:$0xff]
    %v529 = vld [vmem:[%s8 + $0x1a8] sm:$0xff]
    %v530 = vld [vmem:[%s8 + $0x1b0] sm:$0xff]
    %v531 = vld [vmem:[%s8 + $0x1b8] sm:$0xff]
    %v532 = vld [vmem:[%s8 + $0x1c0] sm:$0xff]
    %v533 = vld [vmem:[%s8 + $0x1c8] sm:$0xff]
    %v534 = vld [vmem:[%s8 + $0x1d0] sm:$0xff]
    %v535 = vld [vmem:[%s8 + $0x1d8] sm:$0xff]
    %v536 = vld [vmem:[%s8 + $0x1e0] sm:$0xff]
    %v537 = vld [vmem:[%s8 + $0x1e8] sm:$0xff]
    %v538 = vld [vmem:[%s8 + $0x1f0] sm:$0xff]
    %v539 = vld [vmem:[%s8 + $0x1f8] sm:$0xff]
    %v540 = vld [vmem:[%s9] sm:$0xf]
    %v542 = vlaneseq
    %v543 = vshrl.u32 %v542, 7
    %v544 = vsub.s32 0, %v543
    %v545 = vrot.slane %v540, %v544
    %v546 = vlaneseq
    %v547 = vshrl.u32 %v546, 7
    %v548 = vsub.s32 1, %v547
    %v549 = vrot.slane %v540, %v548
    %v550 = vlaneseq
    %v551 = vshrl.u32 %v550, 7
    %v552 = vsub.s32 2, %v551
    %v553 = vrot.slane %v540, %v552
    %v554 = vlaneseq
    %v555 = vshrl.u32 %v554, 7
    %v556 = vsub.s32 3, %v555
    %v557 = vrot.slane %v540, %v556
    %562 = vmatprep.subr.mxu0 %v477
    %563 = vmatpush1.msra.mxu0 %v476
    %564 = vmatprep.subr.mxu0 %v481
    %565 = vmatpush1.msra.mxu0 %v480
    %566 = vmatprep.subr.mxu0 %v485
    %567 = vmatpush1.msra.mxu0 %v484
    %568 = vmatprep.subr.mxu0 %v489
    %569 = vmatpush1.msra.mxu0 %v488
    %570 = vmatprep.subr.mxu0 %v493
    %571 = vmatpush1.msra.mxu0 %v492
    %572 = vmatprep.subr.mxu0 %v497
    %573 = vmatpush1.msra.mxu0 %v496
    %574 = vmatprep.subr.mxu0 %v501
    %575 = vmatpush1.msra.mxu0 %v500
    %576 = vmatprep.subr.mxu0 %v505
    %577 = vmatpush1.msra.mxu0 %v504
    %578 = vmatprep.subr.mxu0 %v509
    %579 = vmatpush1.msra.mxu0 %v508
    %580 = vmatprep.subr.mxu0 %v513
    %581 = vmatpush1.msra.mxu0 %v512
    %582 = vmatprep.subr.mxu0 %v517
    %583 = vmatpush1.msra.mxu0 %v516
    %584 = vmatprep.subr.mxu0 %v521
    %585 = vmatpush1.msra.mxu0 %v520
    %586 = vmatprep.subr.mxu0 %v525
    %587 = vmatpush1.msra.mxu0 %v524
    %588 = vmatprep.subr.mxu0 %v529
    %589 = vmatpush1.msra.mxu0 %v528
    %590 = vmatprep.subr.mxu0 %v533
    %591 = vmatpush1.msra.mxu0 %v532
    %592 = vmatprep.subr.mxu0 %v537
    %593 = vmatpush1.msra.mxu0 %v536
    %594 = vmatprep.subr.mxu0 0.0
    %595 = vmatpush1.msra.mxu0 0.0
    %596 = vmatprep.subr.mxu0 0.0
    %597 = vmatpush1.msra.mxu0 0.0
    %598 = vmatprep.subr.mxu0 0.0
    %599 = vmatpush1.msra.mxu0 0.0
    %600 = vmatprep.subr.mxu0 0.0
    %601 = vmatpush1.msra.mxu0 0.0
    %602 = vmatprep.subr.mxu0 0.0
    %603 = vmatpush1.msra.mxu0 0.0
    %604 = vmatprep.subr.mxu0 0.0
    %605 = vmatpush1.msra.mxu0 0.0
    %606 = vmatprep.subr.mxu0 0.0
    %607 = vmatpush1.msra.mxu0 0.0
    %608 = vmatprep.subr.mxu0 0.0
    %609 = vmatpush1.msra.mxu0 0.0
    %610 = vmatprep.subr.mxu0 0.0
    %611 = vmatpush1.msra.mxu0 0.0
    %612 = vmatprep.subr.mxu0 0.0
    %613 = vmatpush1.msra.mxu0 0.0
    %614 = vmatprep.subr.mxu0 0.0
    %615 = vmatpush1.msra.mxu0 0.0
    %616 = vmatprep.subr.mxu0 0.0
    %617 = vmatpush1.msra.mxu0 0.0
    %618 = vmatprep.subr.mxu0 0.0
    %619 = vmatpush1.msra.mxu0 0.0
    %620 = vmatprep.subr.mxu0 0.0
    %621 = vmatpush1.msra.mxu0 0.0
    %622 = vmatprep.subr.mxu0 0.0
    %623 = vmatpush1.msra.mxu0 0.0
    %624 = vmatprep.subr.mxu0 0.0
    %625 = vmatpush1.msra.mxu0 0.0
    %626 = vmatprep.mubr.f32.mxu0 0.0
    %627 = vmatmul.mubr.f32.gmra.mrb[0].mxu0 %v475
    %v628 = vpop.f32.mrb[0].mxu0
    %v629 = vadd.f32 %v545, %v628
    %v630 = vpop.f32.mrb[0].mxu0
    %v631 = vadd.f32 %v549, %v630
    %632 = vdwg.mxu0
    %633 = vmatprep.subr.mxu0 %v479
    %634 = vmatpush1.msra.mxu0 %v478
    %635 = vmatprep.subr.mxu0 %v483
    %636 = vmatpush1.msra.mxu0 %v482
    %637 = vmatprep.subr.mxu0 %v487
    %638 = vmatpush1.msra.mxu0 %v486
    %639 = vmatprep.subr.mxu0 %v491
    %640 = vmatpush1.msra.mxu0 %v490
    %641 = vmatprep.subr.mxu0 %v495
    %642 = vmatpush1.msra.mxu0 %v494
    %643 = vmatprep.subr.mxu0 %v499
    %644 = vmatpush1.msra.mxu0 %v498
    %645 = vmatprep.subr.mxu0 %v503
    %646 = vmatpush1.msra.mxu0 %v502
    %647 = vmatprep.subr.mxu0 %v507
    %648 = vmatpush1.msra.mxu0 %v506
    %649 = vmatprep.subr.mxu0 %v511
    %650 = vmatpush1.msra.mxu0 %v510
    %651 = vmatprep.subr.mxu0 %v515
    %652 = vmatpush1.msra.mxu0 %v514
    %653 = vmatprep.subr.mxu0 %v519
    %654 = vmatpush1.msra.mxu0 %v518
    %655 = vmatprep.subr.mxu0 %v523
    %656 = vmatpush1.msra.mxu0 %v522
    %657 = vmatprep.subr.mxu0 %v527
    %658 = vmatpush1.msra.mxu0 %v526
    %659 = vmatprep.subr.mxu0 %v531
    %660 = vmatpush1.msra.mxu0 %v530
    %661 = vmatprep.subr.mxu0 %v535
    %662 = vmatpush1.msra.mxu0 %v534
    %663 = vmatprep.subr.mxu0 %v539
    %664 = vmatpush1.msra.mxu0 %v538
    %665 = vmatprep.subr.mxu0 0.0
    %666 = vmatpush1.msra.mxu0 0.0
    %667 = vmatprep.subr.mxu0 0.0
    %668 = vmatpush1.msra.mxu0 0.0
    %669 = vmatprep.subr.mxu0 0.0
    %670 = vmatpush1.msra.mxu0 0.0
    %671 = vmatprep.subr.mxu0 0.0
    %672 = vmatpush1.msra.mxu0 0.0
    %673 = vmatprep.subr.mxu0 0.0
    %674 = vmatpush1.msra.mxu0 0.0
    %675 = vmatprep.subr.mxu0 0.0
    %676 = vmatpush1.msra.mxu0 0.0
    %677 = vmatprep.subr.mxu0 0.0
    %678 = vmatpush1.msra.mxu0 0.0
    %679 = vmatprep.subr.mxu0 0.0
    %680 = vmatpush1.msra.mxu0 0.0
    %681 = vmatprep.subr.mxu0 0.0
    %682 = vmatpush1.msra.mxu0 0.0
    %683 = vmatprep.subr.mxu0 0.0
    %684 = vmatpush1.msra.mxu0 0.0
    %685 = vmatprep.subr.mxu0 0.0
    %686 = vmatpush1.msra.mxu0 0.0
    %687 = vmatprep.subr.mxu0 0.0
    %688 = vmatpush1.msra.mxu0 0.0
    %689 = vmatprep.subr.mxu0 0.0
    %690 = vmatpush1.msra.mxu0 0.0
    %691 = vmatprep.subr.mxu0 0.0
    %692 = vmatpush1.msra.mxu0 0.0
    %693 = vmatprep.subr.mxu0 0.0
    %694 = vmatpush1.msra.mxu0 0.0
    %695 = vmatprep.subr.mxu0 0.0
    %696 = vmatpush1.msra.mxu0 0.0
    %697 = vmatprep.mubr.f32.mxu0 0.0
    %698 = vmatmul.mubr.f32.gmra.mrb[0].mxu0 %v475
    %v699 = vpop.f32.mrb[0].mxu0
    %v700 = vadd.f32 %v553, %v699
    %v701 = vpop.f32.mrb[0].mxu0
    %v702 = vadd.f32 %v557, %v701
    %703 = vdwg.mxu0
    %v704 = vsub.f32 0.0, %v629
    %v705 = vsub.f32 0.0, %v631
    %v706 = vsub.f32 0.0, %v700
    %v707 = vsub.f32 0.0, %v702
    %v708 = vmul.f32 %v704, 1.442695
    %v709 = vpow.pop %v708
    %v710 = vmul.f32 %v705, 1.442695
    %v711 = vpow.pop %v710
    %v712 = vmul.f32 %v706, 1.442695
    %v713 = vpow.pop %v712
    %v714 = vmul.f32 %v707, 1.442695
    %v715 = vpow.pop %v714
    %v716 = vadd.f32 %v709, 1.0
    %v717 = vadd.f32 %v711, 1.0
    %v718 = vadd.f32 %v713, 1.0
    %v719 = vadd.f32 %v715, 1.0
    %v720 = vrcp.pop %v716
    %v721 = vrcp.pop %v717
    %v722 = vrcp.pop %v718
    %v723 = vrcp.pop %v719
    %v728 = vcombine.low %v720, %v721
    %v729 = vcombine.low %v722, %v723
    %v731 = vunpack.c.l.s4 1983009808
    %v732 = vunpack.c.0.s8 %v731
    %v733 = vlaneseq
    %v734 = vshrl.u32 %v733, 7
    %v735 = vsub.s32 %v732, %v734
    %v736 = vrot.slane %v728, %v735
    %v738 = vunpack.c.l.s4 1983009808
    %v739 = vunpack.c.0.s8 %v738
    %v740 = vlaneseq
    %v741 = vshrl.u32 %v740, 7
    %v742 = vsub.s32 %v739, %v741
    %v743 = vrot.slane %v729, %v742
    %v744 = vcombine.low %v736, %v743
    %vm746 = vcmask 1041408
    %vm747 = vcmask 1043458
    %vm748 = vmor %vm747, %vm746
    %vm749 = vcmask 1045508
    %vm750 = vmor %vm749, %vm748
    %vm751 = vcmask 130054
    %vm752 = vmor %vm751, %vm750
    %753 = vst.msk [vmem:[#allocation2] sm:$0xff] %vm752, %v744
    %v756 = vcombine.low %v373, %v375
    %v758 = vunpack.c.l.s4 1983009808
    %v759 = vunpack.c.0.s8 %v758
    %v760 = vlaneseq
    %v761 = vshrl.u32 %v760, 7
    %v762 = vsub.s32 %v759, %v761
    %v763 = vrot.slane %v756, %v762
    %765 = vst [vmem:[%s11] sm:$0xf] %v763
    // Predicated region
    $region42: #{vae_forward.1} parent=1 // pred_check
      _
    $region43: #{vae_forward.1} parent=1 // pred_check_branch
      %767 = sbr.rel (0) target = $region45
    $region44: #{vae_forward.1} parent=1 // pred_region
      %s769 = ssub.s32 128, 128
      %770 = vsyncadd [#allocation3], %s769
      %s772 = sshll.u32 [#allocation2], 4
      %s773 = int_to_ptr.vmem [resolvable:$true] %s772
      %775 = dma.vmem_to_hbm [thread:$0]  %s773, 128, %s10, [#allocation3]
    $region45: #{vae_forward.1} parent=1 // pred_fallthru
      _
    // Predicated region
    $region46: #{vae_forward.1} parent=1 // pred_check
      _
    $region47: #{vae_forward.1} parent=1 // pred_check_branch
      %777 = sbr.rel (0) target = $region49
    $region48: #{vae_forward.1} parent=1 // pred_region
      _
    $region49: #{vae_forward.1} parent=1 // pred_fallthru
      _
    // Predicated region
    $region50: #{vae_forward.1} parent=1 // pred_check
      _
    $region51: #{vae_forward.1} parent=1 // pred_check_branch
      %779 = sbr.rel (0) target = $region53
    $region52: #{vae_forward.1} parent=1 // pred_region
      %780 = dma.done [#allocation3], 128
    $region53: #{vae_forward.1} parent=1 // pred_fallthru
      _
    // Predicated region
    $region54: #{vae_forward.1} parent=1 // pred_check
      _
    $region55: #{vae_forward.1} parent=1 // pred_check_branch
      %782 = sbr.rel (0) target = $region57
    $region56: #{vae_forward.1} parent=1 // pred_region
      _
    $region57: #{vae_forward.1} parent=1 // pred_fallthru
      _
    %783 = vsyncpa [#allocation3], 1

</llo_original>
